<compile_context>
chip_gen: v6e
topology: v6e:2x2x1
jax: 0.10.0
libtpu: 0.0.40
codegen_flags: <defaults>
</compile_context>

<pallas_src>
import functools

import jax
import jax.numpy as jnp
from jax.experimental import pallas as pl
from jax.experimental.pallas import tpu as pltpu


def _round_up(a, m):
    return (a + m - 1) // m * m


def _build_levels(tree):
    """Group non-root nodes by depth; parents are always at a smaller depth."""
    key_to_idx = {tuple(m): i for i, m in enumerate(tree)}
    by_depth = {}
    for i, m in enumerate(tree):
        if len(m) > 1:
            by_depth.setdefault(len(m), []).append(i)
    levels = []
    for d in sorted(by_depth):
        node_ids = sorted(by_depth[d])
        parent_ids = [key_to_idx[tuple(tree[n][:-1])] for n in node_ids]
        levels.append((tuple(node_ids), tuple(parent_ids)))
    return levels


def init_params(key, tree, feature_dim):
    """PyTorch nn.Linear style params: per node (W [F, in_dim], bias [F])."""
    F = feature_dim
    params = []
    for map_rel in tree:
        in_dim = F + 1 if len(map_rel) > 1 else 1
        key, kw, kb = jax.random.split(key, 3)
        bound = 1.0 / float(in_dim) ** 0.5
        W = jax.random.uniform(kw, (F, in_dim), jnp.float32, -bound, bound)
        bias = jax.random.uniform(kb, (F,), jnp.float32, -bound, bound)
        params.append((W, bias))
    return params


def pack_params(params, tree, feature_dim):
    """Repack per-node Linear params into the kernel's fused layout.

    Returns:
      wx_expand [Np, N*F]: row n carries node n's scalar-column weight in
        columns [n*F,(n+1)*F); row N carries ALL biases (the wrapper feeds a
        constant-1 column at that index), folding the bias add into the
        base matmul. Remaining padded rows are zero.
      level_ws: one widened [N*F, N*F] weight per tree level with wp[n]
        placed at rows parent(n)*F.., cols n*F.., so a single lane-dense
        `acc += acc @ W_level` per level applies every parent contribution.
    """
    F = feature_dim
    N = len(tree)
    Np = _round_up(N + 1, 8)          # +1 bias column, sublane-aligned
    levels = _build_levels(tree)

    wx_expand = jnp.zeros((Np, N * F), jnp.float32)
    wp = {}
    for i, (map_rel, (W, bias)) in enumerate(zip(tree, params)):
        if len(map_rel) > 1:
            scal = W[:, F]            # weight of the raw feature column
            wp[i] = W[:, :F].T        # parent_embed @ wp == parent part
        else:
            scal = W[:, 0]
        wx_expand = wx_expand.at[i, i * F:(i + 1) * F].set(scal)
        wx_expand = wx_expand.at[N, i * F:(i + 1) * F].set(bias)   # bias row

    # TODO(synk): for large trees (N >~ 128) wx_expand is O(N^2*F) and the
    # widened level weights are O((N*F)^2) of resident VMEM (critical on
    # v7x's 64 MiB); switch to a VPU broadcast-multiply base term and
    # block-diagonal level weights (or tile N) in that regime.
    level_ws = []
    for node_ids, parent_ids in levels:
        Wl = jnp.zeros((N * F, N * F), jnp.float32)
        for n, p in zip(node_ids, parent_ids):
            Wl = Wl.at[p * F:(p + 1) * F, n * F:(n + 1) * F].set(wp[n])
        level_ws.append(Wl)

    return wx_expand, tuple(level_ws)


def _hyper_embed_kernel(xcols_ref, wxe_ref, *rest, matmul_dtype, use_scratch):
    """One batch tile of the full tree of linears.

    xcols_ref : [TB, Np]    gathered scalar columns + constant-1 bias column
    wxe_ref   : [Np, N*F]   expand weight (scalar weights + bias row)
    rest      : per-level widened weights [N*F, N*F], out [TB, N*F],
                optional f32 accumulator scratch [TB, N*F] (bf16-out path)
    """
    if use_scratch:
        *level_w_refs, out_ref, acc_ref = rest
    else:
        *level_w_refs, out_ref = rest
        acc_ref = out_ref                      # accumulate directly into out

    md = matmul_dtype

    # Base term (x_col * w_scal + b) for every node: one MXU matmul, one
    # lane-dense store of the whole (TB, N*F) slab.
    acc_ref[...] = jnp.dot(xcols_ref[...].astype(md), wxe_ref[...],
                           preferred_element_type=jnp.float32)

    # Parent contributions: one lane-dense widened matmul per tree level.
    # Parents live at earlier levels, so their columns of acc are final.
    for w_ref in level_w_refs:
        acc_ref[...] += jnp.dot(acc_ref[...].astype(md), w_ref[...],
                                preferred_element_type=jnp.float32)

    if use_scratch:
        out_ref[...] = acc_ref[...].astype(out_ref.dtype)


def hyper_embedding_pallas(x, packed, tree, feature_dim, *,
                           matmul_dtype=jnp.float32,   # bf16 OK on v6e/v7x (revalidate vs depth)
                           out_dtype=jnp.bfloat16,     # chain stays f32; halves HBM writeback
                           batch_tile=1024,
                           core_parallel=False):       # True: shard batch grid across v7x TCs
    wx_expand, level_ws = packed
    B = x.shape[0]
    N = len(tree)
    F = feature_dim
    Np = wx_expand.shape[0]
    NF = N * F

    md = jnp.dtype(matmul_dtype)
    out_dt = jnp.dtype(out_dtype)

    # Pre-cast resident weights once (no per-step VPU re-cast in the kernel).
    wx_expand = wx_expand.astype(md)
    level_ws = tuple(w.astype(md) for w in level_ws)

    # Gather each node's scalar feature column + a constant-1 bias column.
    cols = jnp.asarray([m[-1] for m in tree], dtype=jnp.int32)
    xcols = jnp.take(x, cols, axis=1).astype(jnp.float32)          # [B, N]
    xcols = jnp.concatenate([xcols, jnp.ones((B, 1), jnp.float32)], axis=1)
    if Np != N + 1:
        xcols = jnp.pad(xcols, ((0, 0), (0, Np - (N + 1))))

    # Batch tiling: large tiles amortize the ~0.35us per-grid-step overhead.
    TB = max(8, _round_up(min(batch_tile, _round_up(B, 8)), 8))
    Bp = _round_up(B, TB)
    if Bp != B:
        xcols = jnp.pad(xcols, ((0, Bp - B), (0, 0)))
    grid = (Bp // TB,)

    use_scratch = out_dt != jnp.dtype(jnp.float32)

    kernel = functools.partial(_hyper_embed_kernel,
                               matmul_dtype=md, use_scratch=use_scratch)

    # Advisory cost estimate.
    flops = 2 * Bp * Np * NF + len(level_ws) * 2 * Bp * NF * NF
    w_bytes = (wx_expand.size + sum(w.size for w in level_ws)) * md.itemsize
    bytes_accessed = xcols.size * 4 + w_bytes + Bp * NF * out_dt.itemsize

    # VMEM budget: double-buffered io tiles + (conservatively double-counted)
    # resident weights + optional f32 accumulator, with headroom; clamp below
    # v7x's 64 MiB physical VMEM.
    tile_bytes = 2 * (TB * Np * 4 + TB * NF * out_dt.itemsize)
    scratch_bytes = TB * NF * 4 if use_scratch else 0
    vmem_needed = tile_bytes + 2 * w_bytes + scratch_bytes
    vmem_limit = int(min(max(2 * vmem_needed + (1 << 20), 16 * 1024 * 1024),
                         48 * 1024 * 1024))

    weight_specs = [pl.BlockSpec(wx_expand.shape, lambda i: (0, 0))]
    weight_specs += [pl.BlockSpec(w.shape, lambda i: (0, 0)) for w in level_ws]
    scratch_shapes = [pltpu.VMEM((TB, NF), jnp.float32)] if use_scratch else []

    dim_sem = (pltpu.CORE_PARALLEL,) if core_parallel else ("parallel",)

    out = pl.pallas_call(
        kernel,
        out_shape=jax.ShapeDtypeStruct((Bp, NF), out_dt),
        grid_spec=pltpu.PrefetchScalarGridSpec(
            num_scalar_prefetch=0,
            grid=grid,
            in_specs=[pl.BlockSpec((TB, Np), lambda i: (i, 0))] + weight_specs,
            out_specs=pl.BlockSpec((TB, NF), lambda i: (i, 0)),
            scratch_shapes=scratch_shapes),
        compiler_params=pltpu.CompilerParams(
            dimension_semantics=dim_sem,
            vmem_limit_bytes=vmem_limit),
        cost_estimate=pl.CostEstimate(flops=int(flops), transcendentals=0,
                                      bytes_accessed=int(bytes_accessed)),
    )(xcols, wx_expand, *level_ws)
    return out[:B]


def hyper_embedding_ref(x, params, tree):
    """Pure-JAX mirror of the PyTorch forward (verification only)."""
    embeds = {}
    outs = []
    for map_rel, (W, bias) in zip(tree, params):
        inp = x[:, map_rel[-1]:map_rel[-1] + 1]
        if len(map_rel) > 1:
            inp = jnp.concatenate([embeds[tuple(map_rel[:-1])], inp], axis=1)
        e = inp @ W.T + bias
        embeds[tuple(map_rel)] = e
        outs.append(e)
    return jnp.concatenate(outs, axis=1)


if __name__ == "__main__":
    feature_dim = 32
    tree = [[0], [1], [0, 2], [0, 2, 3], [1, 4]]   # parents always appear first
    B = 8
    num_features = 8

    key = jax.random.PRNGKey(0)
    kx, kp = jax.random.split(key)
    x = jax.random.normal(kx, (B, num_features), jnp.float32)

    params = init_params(kp, tree, feature_dim)
    packed = pack_params(params, tree, feature_dim)

    ref = hyper_embedding_ref(x, params, tree)

    # f32 output path: accumulates directly into the output tile (no scratch).
    out_f32 = hyper_embedding_pallas(x, packed, tree, feature_dim,
                                     out_dtype=jnp.float32)
    out_f32 = jax.block_until_ready(out_f32)
    assert out_f32.shape == (B, len(tree) * feature_dim), out_f32.shape
    assert jnp.allclose(out_f32, ref, atol=1e-5, rtol=1e-5), "f32 mismatch vs reference"

    # Default bf16-output path: f32 chain in VMEM scratch, bf16 writeback only.
    out_bf16 = hyper_embedding_pallas(x, packed, tree, feature_dim)
    out_bf16 = jax.block_until_ready(out_bf16)
    assert out_bf16.dtype == jnp.bfloat16, out_bf16.dtype
    assert jnp.allclose(out_bf16.astype(jnp.float32), ref, atol=5e-2, rtol=2e-2), \
        "bf16 mismatch vs reference"

    print("KERNEL_OK")
</pallas_src>

<mosaic_0001>
module attributes {stable_mosaic.version = 11 : i64} {
  func.func @_hyper_embed_kernel(%arg0: i32, %arg1: memref<8x8xf32, #tpu.memory_space<vmem>>, %arg2: memref<8x160xf32, #tpu.memory_space<vmem>>, %arg3: memref<160x160xf32, #tpu.memory_space<vmem>>, %arg4: memref<160x160xf32, #tpu.memory_space<vmem>>, %arg5: memref<8x160xf32, #tpu.memory_space<vmem>>) attributes {dimension_semantics = [#tpu.dimension_semantics<parallel>], iteration_bounds = array<i64: 1>, scalar_prefetch = 0 : i64, scratch_operands = 0 : i64, tpu.core_type = #tpu.core_type<tc>, window_params = [{transform_indices = @transform_0, window_bounds = array<i64: 8, 8>}, {pipeline_mode = #tpu.pipeline_mode<synchronous>, transform_indices = @transform_1, window_bounds = array<i64: 8, 160>}, {pipeline_mode = #tpu.pipeline_mode<synchronous>, transform_indices = @transform_2, window_bounds = array<i64: 160, 160>}, {pipeline_mode = #tpu.pipeline_mode<synchronous>, transform_indices = @transform_3, window_bounds = array<i64: 160, 160>}, {transform_indices = @transform_4, window_bounds = array<i64: 8, 160>}]} {
    %c0 = arith.constant 0 : index
    %c0_0 = arith.constant 0 : index
    %0 = vector.load %arg1[%c0, %c0_0] : memref<8x8xf32, #tpu.memory_space<vmem>>, vector<8x8xf32>
    %c0_1 = arith.constant 0 : index
    %c0_2 = arith.constant 0 : index
    %1 = vector.load %arg2[%c0_1, %c0_2] : memref<8x160xf32, #tpu.memory_space<vmem>>, vector<8x160xf32>
    %cst = arith.constant dense<0.000000e+00> : vector<8x160xf32>
    %2 = tpu.matmul %0, %1, %cst {dimension_numbers = #tpu.dot_dimension_numbers<[1], [0], [0], [1], [0, 0, 1, 1], [], []>} : vector<8x8xf32>, vector<8x160xf32>, vector<8x160xf32> -> vector<8x160xf32>
    %c0_3 = arith.constant 0 : index
    %c0_4 = arith.constant 0 : index
    %3 = vector.load %arg5[%c0_3, %c0_4] : memref<8x160xf32, #tpu.memory_space<vmem>>, vector<8x160xf32>
    tpu.vector_store %arg5[%c0_3, %c0_4], %2 {strides = array<i32>} : memref<8x160xf32, #tpu.memory_space<vmem>>, vector<8x160xf32>,
    %c0_5 = arith.constant 0 : index
    %c0_6 = arith.constant 0 : index
    %4 = vector.load %arg5[%c0_5, %c0_6] : memref<8x160xf32, #tpu.memory_space<vmem>>, vector<8x160xf32>
    %c0_7 = arith.constant 0 : index
    %c0_8 = arith.constant 0 : index
    %5 = vector.load %arg5[%c0_7, %c0_8] : memref<8x160xf32, #tpu.memory_space<vmem>>, vector<8x160xf32>
    %c0_9 = arith.constant 0 : index
    %c0_10 = arith.constant 0 : index
    %6 = vector.load %arg3[%c0_9, %c0_10] : memref<160x160xf32, #tpu.memory_space<vmem>>, vector<160x160xf32>
    %cst_11 = arith.constant dense<0.000000e+00> : vector<8x160xf32>
    %7 = tpu.matmul %5, %6, %cst_11 {dimension_numbers = #tpu.dot_dimension_numbers<[1], [0], [0], [1], [0, 0, 1, 1], [], []>} : vector<8x160xf32>, vector<160x160xf32>, vector<8x160xf32> -> vector<8x160xf32>
    %8 = arith.addf %4, %7 : vector<8x160xf32>
    %c0_12 = arith.constant 0 : index
    %c0_13 = arith.constant 0 : index
    %9 = vector.load %arg5[%c0_12, %c0_13] : memref<8x160xf32, #tpu.memory_space<vmem>>, vector<8x160xf32>
    tpu.vector_store %arg5[%c0_12, %c0_13], %8 {strides = array<i32>} : memref<8x160xf32, #tpu.memory_space<vmem>>, vector<8x160xf32>,
    %c0_14 = arith.constant 0 : index
    %c0_15 = arith.constant 0 : index
    %10 = vector.load %arg5[%c0_14, %c0_15] : memref<8x160xf32, #tpu.memory_space<vmem>>, vector<8x160xf32>
    %c0_16 = arith.constant 0 : index
    %c0_17 = arith.constant 0 : index
    %11 = vector.load %arg5[%c0_16, %c0_17] : memref<8x160xf32, #tpu.memory_space<vmem>>, vector<8x160xf32>
    %c0_18 = arith.constant 0 : index
    %c0_19 = arith.constant 0 : index
    %12 = vector.load %arg4[%c0_18, %c0_19] : memref<160x160xf32, #tpu.memory_space<vmem>>, vector<160x160xf32>
    %cst_20 = arith.constant dense<0.000000e+00> : vector<8x160xf32>
    %13 = tpu.matmul %11, %12, %cst_20 {dimension_numbers = #tpu.dot_dimension_numbers<[1], [0], [0], [1], [0, 0, 1, 1], [], []>} : vector<8x160xf32>, vector<160x160xf32>, vector<8x160xf32> -> vector<8x160xf32>
    %14 = arith.addf %10, %13 : vector<8x160xf32>
    %c0_21 = arith.constant 0 : index
    %c0_22 = arith.constant 0 : index
    %15 = vector.load %arg5[%c0_21, %c0_22] : memref<8x160xf32, #tpu.memory_space<vmem>>, vector<8x160xf32>
    tpu.vector_store %arg5[%c0_21, %c0_22], %14 {strides = array<i32>} : memref<8x160xf32, #tpu.memory_space<vmem>>, vector<8x160xf32>,
    return
  }
  func.func @transform_0(%arg0: i32) -> (i32, i32) {
    %c0_i32 = arith.constant 0 : i32
    %c0_i32_0 = arith.constant 0 : i32
    return %arg0, %c0_i32 : i32, i32
  }
  func.func @transform_1(%arg0: i32) -> (i32, i32) {
    %c0_i32 = arith.constant 0 : i32
    %c0_i32_0 = arith.constant 0 : i32
    %c0_i32_1 = arith.constant 0 : i32
    return %c0_i32, %c0_i32_0 : i32, i32
  }
  func.func @transform_2(%arg0: i32) -> (i32, i32) {
    %c0_i32 = arith.constant 0 : i32
    %c0_i32_0 = arith.constant 0 : i32
    %c0_i32_1 = arith.constant 0 : i32
    return %c0_i32, %c0_i32_0 : i32, i32
  }
  func.func @transform_3(%arg0: i32) -> (i32, i32) {
    %c0_i32 = arith.constant 0 : i32
    %c0_i32_0 = arith.constant 0 : i32
    %c0_i32_1 = arith.constant 0 : i32
    return %c0_i32, %c0_i32_0 : i32, i32
  }
  func.func @transform_4(%arg0: i32) -> (i32, i32) {
    %c0_i32 = arith.constant 0 : i32
    %c0_i32_0 = arith.constant 0 : i32
    return %arg0, %c0_i32 : i32, i32
  }
}

</mosaic_0001>

<llo_original>
// kernel: tpu_custom_call.1
$region0: #{tpu_custom_call.1}
  #allocation0 [shape = 'u32[]', space=smem, size = 0x4, offset = 0x4, fixed_abs, tag = 'smem constant byte address 0x4 - core index']
  #allocation1 [shape = 'u32[144,128]{1,0:T(1,128)}', space=vmem, size = 0x12000, scoped, tag = 'internal scratch']
  %s0 = inlined_call_operand.hbm [shape: f32[8,8], index: 0, kind: input, shape index: {}]
  %s1 = inlined_call_operand.hbm [shape: f32[8,160], index: 1, kind: input, shape index: {}]
  %s2 = inlined_call_operand.hbm [shape: f32[160,160], index: 2, kind: input, shape index: {}]
  %s3 = inlined_call_operand.hbm [shape: f32[160,160], index: 3, kind: input, shape index: {}]
  %s4 = inlined_call_operand.hbm [shape: f32[8,160], index: 4, kind: output, shape index: {}]
  %s5 = sld [smem:[#allocation0]]
  $region42: #{tpu_custom_call.1} parent=0
    _
  %s7 = ssub.s32 1, %s5
  %s8 = scalar_select 0, %s7, %s5
  $region1: #{tpu_custom_call.1} parent=0
    #allocation2 [shape = 'u8[4096]{0}', space=vmem, size = 0x1000, scoped, tag = 'input window, operand 0, single buffered']
    #allocation3 [shape = 's32[1]{0}', space=sflag, size = 0x4, scoped, tag = 'scoped memory for tpu_custom_call.1']
    #allocation4 [shape = 's32[1]{0}', space=sflag, size = 0x4, scoped, tag = 'scoped memory for tpu_custom_call.1']
    #allocation5 [shape = 'u8[8192]{0}', space=vmem, size = 0x2000, scoped, tag = 'input window, operand 1, single buffered']
    #allocation6 [shape = 's32[1]{0}', space=sflag, size = 0x4, scoped, tag = 'scoped memory for tpu_custom_call.1']
    #allocation7 [shape = 'u8[163840]{0}', space=vmem, size = 0x28000, scoped, tag = 'input window, operand 2, single buffered']
    #allocation8 [shape = 'u8[163840]{0}', space=vmem, size = 0x28000, scoped, tag = 'input window, operand 3, single buffered']
    #allocation9 [shape = 's32[1]{0}', space=sflag, size = 0x4, scoped, tag = 'scoped memory for tpu_custom_call.1']
    #allocation10 [shape = 'u8[8192]{0}', space=vmem, size = 0x2000, scoped, tag = 'output window, operand 0, single buffered']
    %9 = vsyncpa [#allocation3], 0
    %10 = vsyncpa [#allocation6], 0
    %11 = vsyncpa [#allocation9], 0
    %12 = vsyncpa [#allocation4], 0
    // Predicated region
    $region2: #{tpu_custom_call.1} parent=1 // pred_check
      _
    $region3: #{tpu_custom_call.1} parent=1 // pred_check_branch
      %14 = sbr.rel (0) target = $region5
    $region4: #{tpu_custom_call.1} parent=1 // pred_region
      %s16 = ssub.s32 128, 128
      %17 = vsyncadd [#allocation3], %s16
      %s19 = sshll.u32 [#allocation2], 4
      %s20 = int_to_ptr.vmem [resolvable:$true] %s19
      %22 = dma.hbm_to_vmem [thread:$0]  %s0, 128, %s20, [#allocation3]
    $region5: #{tpu_custom_call.1} parent=1 // pred_fallthru
      _
    // Predicated region
    $region6: #{tpu_custom_call.1} parent=1 // pred_check
      _
    $region7: #{tpu_custom_call.1} parent=1 // pred_check_branch
      %24 = sbr.rel (0) target = $region9
    $region8: #{tpu_custom_call.1} parent=1 // pred_region
      %s26 = ssub.s32 256, 256
      %27 = vsyncadd [#allocation6], %s26
      %s29 = sshll.u32 [#allocation5], 4
      %s30 = int_to_ptr.vmem [resolvable:$true] %s29
      %32 = dma.hbm_to_vmem [thread:$0]  %s1, 256, %s30, [#allocation6]
    $region9: #{tpu_custom_call.1} parent=1 // pred_fallthru
      _
    // Predicated region
    $region10: #{tpu_custom_call.1} parent=1 // pred_check
      _
    $region11: #{tpu_custom_call.1} parent=1 // pred_check_branch
      %34 = sbr.rel (0) target = $region13
    $region12: #{tpu_custom_call.1} parent=1 // pred_region
      %s36 = ssub.s32 5120, 5120
      %37 = vsyncadd [#allocation6], %s36
      %s38 = sshll.u32 [#allocation7], 4
      %s39 = int_to_ptr.vmem [resolvable:$true] %s38
      %44 = dma.hbm_to_vmem [thread:$0]  %s2, 5120, %s39, [#allocation6], 256, 256, 16
    $region13: #{tpu_custom_call.1} parent=1 // pred_fallthru
      _
    // Predicated region
    $region14: #{tpu_custom_call.1} parent=1 // pred_check
      _
    $region15: #{tpu_custom_call.1} parent=1 // pred_check_branch
      %46 = sbr.rel (0) target = $region17
    $region16: #{tpu_custom_call.1} parent=1 // pred_region
      %s48 = ssub.s32 5120, 5120
      %49 = vsyncadd [#allocation9], %s48
      %s50 = sshll.u32 [#allocation8], 4
      %s51 = int_to_ptr.vmem [resolvable:$true] %s50
      %56 = dma.hbm_to_vmem [thread:$0]  %s3, 5120, %s51, [#allocation9], 256, 256, 16
    $region17: #{tpu_custom_call.1} parent=1 // pred_fallthru
      _
    // Predicated region
    $region18: #{tpu_custom_call.1} parent=1 // pred_check
      _
    $region19: #{tpu_custom_call.1} parent=1 // pred_check_branch
      %58 = sbr.rel (0) target = $region21
    $region20: #{tpu_custom_call.1} parent=1 // pred_region
      %59 = dma.done [#allocation3], 128
    $region21: #{tpu_custom_call.1} parent=1 // pred_fallthru
      _
    // Predicated region
    $region22: #{tpu_custom_call.1} parent=1 // pred_check
      _
    $region23: #{tpu_custom_call.1} parent=1 // pred_check_branch
      %61 = sbr.rel (0) target = $region25
    $region24: #{tpu_custom_call.1} parent=1 // pred_region
      %62 = dma.done [#allocation6], 256
    $region25: #{tpu_custom_call.1} parent=1 // pred_fallthru
      _
    // Predicated region
    $region26: #{tpu_custom_call.1} parent=1 // pred_check
      _
    $region27: #{tpu_custom_call.1} parent=1 // pred_check_branch
      %64 = sbr.rel (0) target = $region29
    $region28: #{tpu_custom_call.1} parent=1 // pred_region
      %65 = dma.done [#allocation6], 5120
    $region29: #{tpu_custom_call.1} parent=1 // pred_fallthru
      _
    // Predicated region
    $region30: #{tpu_custom_call.1} parent=1 // pred_check
      _
    $region31: #{tpu_custom_call.1} parent=1 // pred_check_branch
      %67 = sbr.rel (0) target = $region33
    $region32: #{tpu_custom_call.1} parent=1 // pred_region
      %68 = dma.done [#allocation9], 5120
    $region33: #{tpu_custom_call.1} parent=1 // pred_fallthru
      _
    %v69 = vld [vmem:[#allocation2] sm:$0xff]
    %v70 = vld [vmem:[#allocation5] sm:$0xff]
    %v71 = vld [vmem:[#allocation5 + $0x8] sm:$0xff]
    %vm72 = vcmask 64512
    %v74 = vsel %vm72, %v69, 0
    %76 = vmatprep.subr.mxu0 0.0
    %77 = vmatpush1.msra.mxu0 0.0
    %78 = vmatprep.subr.mxu0 0.0
    %79 = vmatpush1.msra.mxu0 0.0
    %80 = vmatprep.subr.mxu0 0.0
    %81 = vmatpush1.msra.mxu0 0.0
    %82 = vmatprep.subr.mxu0 0.0
    %83 = vmatpush1.msra.mxu0 0.0
    %84 = vmatprep.subr.mxu0 0.0
    %85 = vmatpush1.msra.mxu0 0.0
    %86 = vmatprep.subr.mxu0 0.0
    %87 = vmatpush1.msra.mxu0 0.0
    %88 = vmatprep.subr.mxu0 0.0
    %89 = vmatpush1.msra.mxu0 0.0
    %90 = vmatprep.subr.mxu0 0.0
    %91 = vmatpush1.msra.mxu0 0.0
    %92 = vmatprep.subr.mxu0 0.0
    %93 = vmatpush1.msra.mxu0 0.0
    %94 = vmatprep.subr.mxu0 0.0
    %95 = vmatpush1.msra.mxu0 0.0
    %96 = vmatprep.subr.mxu0 0.0
    %97 = vmatpush1.msra.mxu0 0.0
    %98 = vmatprep.subr.mxu0 0.0
    %99 = vmatpush1.msra.mxu0 0.0
    %100 = vmatprep.subr.mxu0 0.0
    %101 = vmatpush1.msra.mxu0 0.0
    %102 = vmatprep.subr.mxu0 0.0
    %103 = vmatpush1.msra.mxu0 0.0
    %104 = vmatprep.subr.mxu0 0.0
    %105 = vmatpush1.msra.mxu0 0.0
    %106 = vmatprep.subr.mxu0 %v71
    %107 = vmatpush1.msra.mxu0 %v70
    %108 = vmatprep.subr.mxu0 0.0
    %109 = vmatpush2.msra.mxu0 0.0
    %110 = vmatprep.subr.mxu0 0.0
    %111 = vmatpush2.msra.mxu0 0.0
    %112 = vmatprep.subr.mxu0 0.0
    %113 = vmatpush2.msra.mxu0 0.0
    %114 = vmatprep.subr.mxu0 0.0
    %115 = vmatpush2.msra.mxu0 0.0
    %116 = vmatprep.subr.mxu0 0.0
    %117 = vmatpush2.msra.mxu0 0.0
    %118 = vmatprep.subr.mxu0 0.0
    %119 = vmatpush2.msra.mxu0 0.0
    %120 = vmatprep.subr.mxu0 0.0
    %121 = vmatpush2.msra.mxu0 0.0
    %122 = vmatprep.subr.mxu0 0.0
    %123 = vmatpush2.msra.mxu0 0.0
    %124 = vmatprep.subr.mxu0 0.0
    %125 = vmatpush2.msra.mxu0 0.0
    %126 = vmatprep.subr.mxu0 0.0
    %127 = vmatpush2.msra.mxu0 0.0
    %128 = vmatprep.subr.mxu0 0.0
    %129 = vmatpush2.msra.mxu0 0.0
    %130 = vmatprep.subr.mxu0 0.0
    %131 = vmatpush2.msra.mxu0 0.0
    %132 = vmatprep.subr.mxu0 0.0
    %133 = vmatpush2.msra.mxu0 0.0
    %134 = vmatprep.subr.mxu0 0.0
    %135 = vmatpush2.msra.mxu0 0.0
    %136 = vmatprep.subr.mxu0 0.0
    %137 = vmatpush2.msra.mxu0 0.0
    %138 = vmatprep.subr.mxu0 0.0
    %139 = vmatpush2.msra.mxu0 0.0
    %140 = vmatprep.mubr.f32.mxu0 0.0
    %141 = vmatmul.mubr.f32.gmra.mxu0 %v74
    %v142 = vpop.f32.mrf.mxu0
    %v143 = vadd.f32 0.0, %v142
    %v144 = vpop.f32.mrf.mxu0
    %v145 = vadd.f32 0.0, %v144
    %146 = vdwg.mxu0
    %147 = vst [vmem:[#allocation10] sm:$0xff] %v143
    %vm148 = vcmask 261120
    %149 = vst.msk [vmem:[#allocation10 + $0x8] sm:$0xff] %vm148, %v145
    %v150 = vld [vmem:[#allocation10] sm:$0xff]
    %v151 = vld [vmem:[#allocation10 + $0x8] sm:$0xff]
    %v152 = vld [vmem:[#allocation7] sm:$0xff]
    %v153 = vld [vmem:[#allocation7 + $0x8] sm:$0xff]
    %v154 = vld [vmem:[#allocation7 + $0x10] sm:$0xff]
    %v155 = vld [vmem:[#allocation7 + $0x18] sm:$0xff]
    %v156 = vld [vmem:[#allocation7 + $0x20] sm:$0xff]
    %v157 = vld [vmem:[#allocation7 + $0x28] sm:$0xff]
    %v158 = vld [vmem:[#allocation7 + $0x30] sm:$0xff]
    %v159 = vld [vmem:[#allocation7 + $0x38] sm:$0xff]
    %v160 = vld [vmem:[#allocation7 + $0x40] sm:$0xff]
    %v161 = vld [vmem:[#allocation7 + $0x48] sm:$0xff]
    %v162 = vld [vmem:[#allocation7 + $0x50] sm:$0xff]
    %v163 = vld [vmem:[#allocation7 + $0x58] sm:$0xff]
    %v164 = vld [vmem:[#allocation7 + $0x60] sm:$0xff]
    %v165 = vld [vmem:[#allocation7 + $0x68] sm:$0xff]
    %v166 = vld [vmem:[#allocation7 + $0x70] sm:$0xff]
    %v167 = vld [vmem:[#allocation7 + $0x78] sm:$0xff]
    %v168 = vld [vmem:[#allocation7 + $0x80] sm:$0xff]
    %v169 = vld [vmem:[#allocation7 + $0x88] sm:$0xff]
    %v170 = vld [vmem:[#allocation7 + $0x90] sm:$0xff]
    %v171 = vld [vmem:[#allocation7 + $0x98] sm:$0xff]
    %v172 = vld [vmem:[#allocation7 + $0xa0] sm:$0xff]
    %v173 = vld [vmem:[#allocation7 + $0xa8] sm:$0xff]
    %v174 = vld [vmem:[#allocation7 + $0xb0] sm:$0xff]
    %v175 = vld [vmem:[#allocation7 + $0xb8] sm:$0xff]
    %v176 = vld [vmem:[#allocation7 + $0xc0] sm:$0xff]
    %v177 = vld [vmem:[#allocation7 + $0xc8] sm:$0xff]
    %v178 = vld [vmem:[#allocation7 + $0xd0] sm:$0xff]
    %v179 = vld [vmem:[#allocation7 + $0xd8] sm:$0xff]
    %v180 = vld [vmem:[#allocation7 + $0xe0] sm:$0xff]
    %v181 = vld [vmem:[#allocation7 + $0xe8] sm:$0xff]
    %v182 = vld [vmem:[#allocation7 + $0xf0] sm:$0xff]
    %v183 = vld [vmem:[#allocation7 + $0xf8] sm:$0xff]
    %v184 = vld [vmem:[#allocation7 + $0x100] sm:$0xff]
    %v185 = vld [vmem:[#allocation7 + $0x108] sm:$0xff]
    %v186 = vld [vmem:[#allocation7 + $0x110] sm:$0xff]
    %v187 = vld [vmem:[#allocation7 + $0x118] sm:$0xff]
    %v188 = vld [vmem:[#allocation7 + $0x120] sm:$0xff]
    %v189 = vld [vmem:[#allocation7 + $0x128] sm:$0xff]
    %v190 = vld [vmem:[#allocation7 + $0x130] sm:$0xff]
    %v191 = vld [vmem:[#allocation7 + $0x138] sm:$0xff]
    %v193 = vsel %vm148, %v151, 0
    %195 = vmatprep.subr.mxu0 %v183
    %196 = vmatpush1.msra.mxu0 %v182
    %197 = vmatprep.subr.mxu0 %v181
    %198 = vmatpush1.msra.mxu0 %v180
    %199 = vmatprep.subr.mxu0 %v179
    %200 = vmatpush1.msra.mxu0 %v178
    %201 = vmatprep.subr.mxu0 %v177
    %202 = vmatpush1.msra.mxu0 %v176
    %203 = vmatprep.subr.mxu0 %v175
    %204 = vmatpush1.msra.mxu0 %v174
    %205 = vmatprep.subr.mxu0 %v173
    %206 = vmatpush1.msra.mxu0 %v172
    %207 = vmatprep.subr.mxu0 %v171
    %208 = vmatpush1.msra.mxu0 %v170
    %209 = vmatprep.subr.mxu0 %v169
    %210 = vmatpush1.msra.mxu0 %v168
    %211 = vmatprep.subr.mxu0 %v167
    %212 = vmatpush1.msra.mxu0 %v166
    %213 = vmatprep.subr.mxu0 %v165
    %214 = vmatpush1.msra.mxu0 %v164
    %215 = vmatprep.subr.mxu0 %v163
    %216 = vmatpush1.msra.mxu0 %v162
    %217 = vmatprep.subr.mxu0 %v161
    %218 = vmatpush1.msra.mxu0 %v160
    %219 = vmatprep.subr.mxu0 %v159
    %220 = vmatpush1.msra.mxu0 %v158
    %221 = vmatprep.subr.mxu0 %v157
    %222 = vmatpush1.msra.mxu0 %v156
    %223 = vmatprep.subr.mxu0 %v155
    %224 = vmatpush1.msra.mxu0 %v154
    %225 = vmatprep.subr.mxu0 %v153
    %226 = vmatpush1.msra.mxu0 %v152
    %227 = vmatprep.subr.mxu0 0.0
    %228 = vmatpush2.msra.mxu0 0.0
    %229 = vmatprep.subr.mxu0 0.0
    %230 = vmatpush2.msra.mxu0 0.0
    %231 = vmatprep.subr.mxu0 0.0
    %232 = vmatpush2.msra.mxu0 0.0
    %233 = vmatprep.subr.mxu0 0.0
    %234 = vmatpush2.msra.mxu0 0.0
    %235 = vmatprep.subr.mxu0 0.0
    %236 = vmatpush2.msra.mxu0 0.0
    %237 = vmatprep.subr.mxu0 0.0
    %238 = vmatpush2.msra.mxu0 0.0
    %239 = vmatprep.subr.mxu0 0.0
    %240 = vmatpush2.msra.mxu0 0.0
    %241 = vmatprep.subr.mxu0 0.0
    %242 = vmatpush2.msra.mxu0 0.0
    %243 = vmatprep.subr.mxu0 0.0
    %244 = vmatpush2.msra.mxu0 0.0
    %245 = vmatprep.subr.mxu0 0.0
    %246 = vmatpush2.msra.mxu0 0.0
    %247 = vmatprep.subr.mxu0 0.0
    %248 = vmatpush2.msra.mxu0 0.0
    %249 = vmatprep.subr.mxu0 0.0
    %250 = vmatpush2.msra.mxu0 0.0
    %251 = vmatprep.subr.mxu0 %v191
    %252 = vmatpush2.msra.mxu0 %v190
    %253 = vmatprep.subr.mxu0 %v189
    %254 = vmatpush2.msra.mxu0 %v188
    %255 = vmatprep.subr.mxu0 %v187
    %256 = vmatpush2.msra.mxu0 %v186
    %257 = vmatprep.subr.mxu0 %v185
    %258 = vmatpush2.msra.mxu0 %v184
    %259 = vmatprep.mubr.f32.mxu0 %v193
    %260 = vmatmul.mubr.f32.gmra.mxu0 %v150
    %v261 = vpop.f32.mrf.mxu0
    %v262 = vadd.f32 0.0, %v261
    %v263 = vpop.f32.mrf.mxu0
    %v264 = vadd.f32 0.0, %v263
    %265 = vdwg.mxu0
    %v266 = vadd.f32 %v150, %v262
    %v267 = vadd.f32 %v151, %v264
    %268 = vst [vmem:[#allocation10] sm:$0xff] %v266
    %269 = vst.msk [vmem:[#allocation10 + $0x8] sm:$0xff] %vm148, %v267
    %v270 = vld [vmem:[#allocation10] sm:$0xff]
    %v271 = vld [vmem:[#allocation10 + $0x8] sm:$0xff]
    %v272 = vld [vmem:[#allocation8] sm:$0xff]
    %v273 = vld [vmem:[#allocation8 + $0x8] sm:$0xff]
    %v274 = vld [vmem:[#allocation8 + $0x10] sm:$0xff]
    %v275 = vld [vmem:[#allocation8 + $0x18] sm:$0xff]
    %v276 = vld [vmem:[#allocation8 + $0x20] sm:$0xff]
    %v277 = vld [vmem:[#allocation8 + $0x28] sm:$0xff]
    %v278 = vld [vmem:[#allocation8 + $0x30] sm:$0xff]
    %v279 = vld [vmem:[#allocation8 + $0x38] sm:$0xff]
    %v280 = vld [vmem:[#allocation8 + $0x40] sm:$0xff]
    %v281 = vld [vmem:[#allocation8 + $0x48] sm:$0xff]
    %v282 = vld [vmem:[#allocation8 + $0x50] sm:$0xff]
    %v283 = vld [vmem:[#allocation8 + $0x58] sm:$0xff]
    %v284 = vld [vmem:[#allocation8 + $0x60] sm:$0xff]
    %v285 = vld [vmem:[#allocation8 + $0x68] sm:$0xff]
    %v286 = vld [vmem:[#allocation8 + $0x70] sm:$0xff]
    %v287 = vld [vmem:[#allocation8 + $0x78] sm:$0xff]
    %v288 = vld [vmem:[#allocation8 + $0x80] sm:$0xff]
    %v289 = vld [vmem:[#allocation8 + $0x88] sm:$0xff]
    %v290 = vld [vmem:[#allocation8 + $0x90] sm:$0xff]
    %v291 = vld [vmem:[#allocation8 + $0x98] sm:$0xff]
    %v292 = vld [vmem:[#allocation8 + $0xa0] sm:$0xff]
    %v293 = vld [vmem:[#allocation8 + $0xa8] sm:$0xff]
    %v294 = vld [vmem:[#allocation8 + $0xb0] sm:$0xff]
    %v295 = vld [vmem:[#allocation8 + $0xb8] sm:$0xff]
    %v296 = vld [vmem:[#allocation8 + $0xc0] sm:$0xff]
    %v297 = vld [vmem:[#allocation8 + $0xc8] sm:$0xff]
    %v298 = vld [vmem:[#allocation8 + $0xd0] sm:$0xff]
    %v299 = vld [vmem:[#allocation8 + $0xd8] sm:$0xff]
    %v300 = vld [vmem:[#allocation8 + $0xe0] sm:$0xff]
    %v301 = vld [vmem:[#allocation8 + $0xe8] sm:$0xff]
    %v302 = vld [vmem:[#allocation8 + $0xf0] sm:$0xff]
    %v303 = vld [vmem:[#allocation8 + $0xf8] sm:$0xff]
    %v304 = vld [vmem:[#allocation8 + $0x100] sm:$0xff]
    %v305 = vld [vmem:[#allocation8 + $0x108] sm:$0xff]
    %v306 = vld [vmem:[#allocation8 + $0x110] sm:$0xff]
    %v307 = vld [vmem:[#allocation8 + $0x118] sm:$0xff]
    %v308 = vld [vmem:[#allocation8 + $0x120] sm:$0xff]
    %v309 = vld [vmem:[#allocation8 + $0x128] sm:$0xff]
    %v310 = vld [vmem:[#allocation8 + $0x130] sm:$0xff]
    %v311 = vld [vmem:[#allocation8 + $0x138] sm:$0xff]
    %v313 = vsel %vm148, %v271, 0
    %315 = vmatprep.subr.mxu0 %v303
    %316 = vmatpush1.msra.mxu0 %v302
    %317 = vmatprep.subr.mxu0 %v301
    %318 = vmatpush1.msra.mxu0 %v300
    %319 = vmatprep.subr.mxu0 %v299
    %320 = vmatpush1.msra.mxu0 %v298
    %321 = vmatprep.subr.mxu0 %v297
    %322 = vmatpush1.msra.mxu0 %v296
    %323 = vmatprep.subr.mxu0 %v295
    %324 = vmatpush1.msra.mxu0 %v294
    %325 = vmatprep.subr.mxu0 %v293
    %326 = vmatpush1.msra.mxu0 %v292
    %327 = vmatprep.subr.mxu0 %v291
    %328 = vmatpush1.msra.mxu0 %v290
    %329 = vmatprep.subr.mxu0 %v289
    %330 = vmatpush1.msra.mxu0 %v288
    %331 = vmatprep.subr.mxu0 %v287
    %332 = vmatpush1.msra.mxu0 %v286
    %333 = vmatprep.subr.mxu0 %v285
    %334 = vmatpush1.msra.mxu0 %v284
    %335 = vmatprep.subr.mxu0 %v283
    %336 = vmatpush1.msra.mxu0 %v282
    %337 = vmatprep.subr.mxu0 %v281
    %338 = vmatpush1.msra.mxu0 %v280
    %339 = vmatprep.subr.mxu0 %v279
    %340 = vmatpush1.msra.mxu0 %v278
    %341 = vmatprep.subr.mxu0 %v277
    %342 = vmatpush1.msra.mxu0 %v276
    %343 = vmatprep.subr.mxu0 %v275
    %344 = vmatpush1.msra.mxu0 %v274
    %345 = vmatprep.subr.mxu0 %v273
    %346 = vmatpush1.msra.mxu0 %v272
    %347 = vmatprep.subr.mxu0 0.0
    %348 = vmatpush2.msra.mxu0 0.0
    %349 = vmatprep.subr.mxu0 0.0
    %350 = vmatpush2.msra.mxu0 0.0
    %351 = vmatprep.subr.mxu0 0.0
    %352 = vmatpush2.msra.mxu0 0.0
    %353 = vmatprep.subr.mxu0 0.0
    %354 = vmatpush2.msra.mxu0 0.0
    %355 = vmatprep.subr.mxu0 0.0
    %356 = vmatpush2.msra.mxu0 0.0
    %357 = vmatprep.subr.mxu0 0.0
    %358 = vmatpush2.msra.mxu0 0.0
    %359 = vmatprep.subr.mxu0 0.0
    %360 = vmatpush2.msra.mxu0 0.0
    %361 = vmatprep.subr.mxu0 0.0
    %362 = vmatpush2.msra.mxu0 0.0
    %363 = vmatprep.subr.mxu0 0.0
    %364 = vmatpush2.msra.mxu0 0.0
    %365 = vmatprep.subr.mxu0 0.0
    %366 = vmatpush2.msra.mxu0 0.0
    %367 = vmatprep.subr.mxu0 0.0
    %368 = vmatpush2.msra.mxu0 0.0
    %369 = vmatprep.subr.mxu0 0.0
    %370 = vmatpush2.msra.mxu0 0.0
    %371 = vmatprep.subr.mxu0 %v311
    %372 = vmatpush2.msra.mxu0 %v310
    %373 = vmatprep.subr.mxu0 %v309
    %374 = vmatpush2.msra.mxu0 %v308
    %375 = vmatprep.subr.mxu0 %v307
    %376 = vmatpush2.msra.mxu0 %v306
    %377 = vmatprep.subr.mxu0 %v305
    %378 = vmatpush2.msra.mxu0 %v304
    %379 = vmatprep.mubr.f32.mxu0 %v313
    %380 = vmatmul.mubr.f32.gmra.mxu0 %v270
    %v381 = vpop.f32.mrf.mxu0
    %v382 = vadd.f32 0.0, %v381
    %v383 = vpop.f32.mrf.mxu0
    %v384 = vadd.f32 0.0, %v383
    %385 = vdwg.mxu0
    %v386 = vadd.f32 %v270, %v382
    %v387 = vadd.f32 %v271, %v384
    %388 = vst [vmem:[#allocation10] sm:$0xff] %v386
    %389 = vst.msk [vmem:[#allocation10 + $0x8] sm:$0xff] %vm148, %v387
    // Predicated region
    $region34: #{tpu_custom_call.1} parent=1 // pred_check
      _
    $region35: #{tpu_custom_call.1} parent=1 // pred_check_branch
      %391 = sbr.rel (0) target = $region37
    $region36: #{tpu_custom_call.1} parent=1 // pred_region
      %s393 = ssub.s32 256, 256
      %394 = vsyncadd [#allocation4], %s393
      %s396 = sshll.u32 [#allocation10], 4
      %s397 = int_to_ptr.vmem [resolvable:$true] %s396
      %399 = dma.vmem_to_hbm [thread:$0]  %s397, 256, %s4, [#allocation4]
    $region37: #{tpu_custom_call.1} parent=1 // pred_fallthru
      _
    // Predicated region
    $region38: #{tpu_custom_call.1} parent=1 // pred_check
      _
    $region39: #{tpu_custom_call.1} parent=1 // pred_check_branch
      %401 = sbr.rel (0) target = $region41
    $region40: #{tpu_custom_call.1} parent=1 // pred_region
      %402 = dma.done [#allocation4], 256
    $region41: #{tpu_custom_call.1} parent=1 // pred_fallthru
      _
    %403 = vsyncpa [#allocation3], 1
    %404 = vsyncpa [#allocation6], 1
    %405 = vsyncpa [#allocation9], 1
    %406 = vsyncpa [#allocation4], 1

</llo_original>
